<compile_context>
chip_gen: v7x
topology: tpu7x:2x2x1
jax: 0.10.0
libtpu: 0.0.40
codegen_flags: <defaults>
</compile_context>

<pallas_src>
import math
import jax
import jax.numpy as jnp
from jax.experimental import pallas as pl
from jax.experimental.pallas import tpu as pltpu


def _round_up(x, m):
    return ((x + m - 1) // m) * m


# ----------------------------------------------------------------------------
# Pallas kernel (transposed layout).  Field tiles arrive lane-dense; the
# (10, TB) input is assembled in VMEM (replaces the old wrapper-side HBM concat).
# ----------------------------------------------------------------------------
def _car_insurance_kernel(age_ref, de_ref, vt_ref, si_ref, ct_ref, ch_ref,
                          w1t_ref, b1_ref, w2t_ref, b2_ref, o_ref):
    x = jnp.concatenate(
        [age_ref[...], de_ref[...], vt_ref[...],
         si_ref[...], ct_ref[...], ch_ref[...]], axis=0)          # (10, TB)
    h = jnp.dot(w1t_ref[...], x,
                preferred_element_type=jnp.float32) + b1_ref[...]  # (60, TB)
    h = jnp.maximum(h, 0.0)                                        # ReLU
    o = jnp.dot(w2t_ref[...], h,
                preferred_element_type=jnp.float32) + b2_ref[...]  # (1, TB)
    o_ref[...] = o.astype(o_ref.dtype)                             # lane-dense store


def car_insurance_forward(age, driving_experience, vehicle_type,
                          speeding_incidents, coverage_type, claims_history,
                          w1t, b1, w2t, b2, *,
                          tb=65536, min_pallas_batch=1024,
                          vmem_limit_bytes=40 * 1024 * 1024):
    """Field tensors are (B, d_i) with d = [1,1,3,1,3,1]. Returns (B, 1)."""
    B = age.shape[0]

    # ---- small-batch fallback (pallas dispatch would dominate) --------------
    if B < min_pallas_batch:
        x = jnp.concatenate([age, driving_experience, vehicle_type,
                             speeding_incidents, coverage_type,
                             claims_history], axis=1)               # (B, 10)
        h = jnp.maximum(x @ w1t.T + b1, 0.0)                        # (B, 60)
        return h @ w2t.T + b2                                       # (B, 1)

    # ---- lane-dense field views: batch on the TPU lane axis -----------------
    age_t = age.reshape(1, B)                   # free row-major reshapes
    de_t = driving_experience.reshape(1, B)
    si_t = speeding_incidents.reshape(1, B)
    ch_t = claims_history.reshape(1, B)
    vt_t = vehicle_type.T                       # (3, B) real (small) transpose
    ct_t = coverage_type.T                      # (3, B)

    # ---- batch-tile (lane) selection -----------------------------------------
    # VMEM per lane, f32, double-buffered (incl. 1/3 -> 8 sublane padding):
    #   4 x (1,tb) = 256 B, 2 x (3,tb) = 128 B, out (1,tb) = 64 B  =>  ~448 B.
    # tb=64K => ~28 MiB, inside the 40 MiB limit below on v5e/v6e/v7x.
    tb = max(128, (int(tb) // 128) * 128)
    b_pad = _round_up(B, 128)
    if b_pad >= 2 * 128:
        # Keep >= 2 grid steps so the "parallel" batch axis can feed both
        # TensorCores on v7x (and keeps the DMA pipeline streaming elsewhere).
        tb = min(tb, _round_up(pl.cdiv(B, 2), 128))
    tb = min(tb, b_pad)
    num_steps = pl.cdiv(B, tb)   # partial final tile -> Pallas boundary masking

    field_spec = lambda d: pl.BlockSpec((d, tb), lambda i: (0, i))   # streamed
    const_spec = lambda r, c: pl.BlockSpec((r, c), lambda i: (0, 0)) # resident

    out_t = pl.pallas_call(
        _car_insurance_kernel,
        out_shape=jax.ShapeDtypeStruct((1, B), jnp.float32),
        grid_spec=pltpu.PrefetchScalarGridSpec(
            num_scalar_prefetch=0,
            grid=(num_steps,),
            in_specs=[
                field_spec(1),            # age
                field_spec(1),            # driving_experience
                field_spec(3),            # vehicle_type
                field_spec(1),            # speeding_incidents
                field_spec(3),            # coverage_type
                field_spec(1),            # claims_history
                const_spec(60, 10),       # W1t (fused block-diagonal)
                const_spec(60, 1),        # b1
                const_spec(1, 60),        # W2t
                const_spec(1, 1),         # b2
            ],
            out_specs=pl.BlockSpec((1, tb), lambda i: (0, i)),
        ),
        compiler_params=pltpu.CompilerParams(
            dimension_semantics=("parallel",),
            vmem_limit_bytes=vmem_limit_bytes),
    )(age_t, de_t, vt_t, si_t, ct_t, ch_t,
      w1t, b1.reshape(60, 1), w2t, b2.reshape(1, 1))

    return out_t.T                                                   # (B, 1)


# ----------------------------------------------------------------------------
# Deterministic parameter construction (PyTorch default nn.Linear init style:
# U(-1/sqrt(fan_in), 1/sqrt(fan_in)), seeded with PRNGKey(0)).
# ----------------------------------------------------------------------------
def _linear_params(key, in_dim, out_dim):
    kw, kb = jax.random.split(key)
    bound = 1.0 / math.sqrt(in_dim)
    w = jax.random.uniform(kw, (out_dim, in_dim), jnp.float32, -bound, bound)
    b = jax.random.uniform(kb, (out_dim,), jnp.float32, -bound, bound)
    return w, b


def build_params(key):
    keys = jax.random.split(key, 7)
    field_dims = [1, 1, 3, 1, 3, 1]                 # age, de, vt, si, ct, ch
    layer_params = [
        _linear_params(keys[i], field_dims[i], 10) for i in range(6)
    ]
    # Fuse six linears into a block-diagonal W1t (60, 10) and bias (60,).
    w1t = jnp.zeros((60, 10), jnp.float32)
    b1 = jnp.zeros((60,), jnp.float32)
    col = 0
    for i, (w, b) in enumerate(layer_params):       # w: (10, in_d)
        in_d = field_dims[i]
        w1t = w1t.at[i * 10:(i + 1) * 10, col:col + in_d].set(w)
        b1 = b1.at[i * 10:(i + 1) * 10].set(b)
        col += in_d
    # Final layer: Linear(60, 1)
    wf, bf = _linear_params(keys[6], 60, 1)
    return w1t, b1, wf, bf, layer_params, (wf, bf)


# Pure-JAX reference mirroring the PyTorch forward exactly.
def reference_forward(inputs, layer_params, final_params):
    embs = []
    for x, (w, b) in zip(inputs, layer_params):
        embs.append(jax.nn.relu(x @ w.T + b))
    x = jnp.concatenate(embs, axis=1)               # (B, 60)
    wf, bf = final_params
    return x @ wf.T + bf                            # (B, 1)


def _make_inputs(key, B):
    ks = jax.random.split(key, 6)
    return [
        jax.random.normal(ks[0], (B, 1), jnp.float32),   # age
        jax.random.normal(ks[1], (B, 1), jnp.float32),   # driving_experience
        jax.random.normal(ks[2], (B, 3), jnp.float32),   # vehicle_type
        jax.random.normal(ks[3], (B, 1), jnp.float32),   # speeding_incidents
        jax.random.normal(ks[4], (B, 3), jnp.float32),   # coverage_type
        jax.random.normal(ks[5], (B, 1), jnp.float32),   # claims_history
    ]


if __name__ == "__main__":
    key = jax.random.PRNGKey(0)
    pkey, dkey1, dkey2, dkey3 = jax.random.split(key, 4)
    w1t, b1, w2t, b2, layer_params, final_params = build_params(pkey)

    # --- Small demo batch (B=2): takes the XLA fallback path (pallas dispatch
    # overhead would dominate at this size). ---
    B = 2
    inputs = _make_inputs(dkey1, B)
    out = jax.block_until_ready(car_insurance_forward(*inputs, w1t, b1, w2t, b2))
    ref = reference_forward(inputs, layer_params, final_params)
    assert out.shape == (B, 1)
    assert jnp.allclose(out, ref, atol=1e-5, rtol=1e-5)

    # --- Pallas path: non-multiple-of-128 batch, 3-step grid with a partial
    # final tile; no padding copies anywhere in the wrapper. ---
    B2 = 700
    inputs2 = _make_inputs(dkey2, B2)
    out2 = jax.block_until_ready(
        car_insurance_forward(*inputs2, w1t, b1, w2t, b2,
                              tb=256, min_pallas_batch=1))
    ref2 = reference_forward(inputs2, layer_params, final_params)
    assert out2.shape == (B2, 1)
    assert jnp.allclose(out2, ref2, atol=1e-5, rtol=1e-5)

    # --- Pallas path: 128-aligned batch, large tile request capped so the grid
    # still has >= 2 parallel steps (keeps both v7x TensorCores fed). ---
    B3 = 4096
    inputs3 = _make_inputs(dkey3, B3)
    out3 = jax.block_until_ready(
        car_insurance_forward(*inputs3, w1t, b1, w2t, b2, min_pallas_batch=1))
    ref3 = reference_forward(inputs3, layer_params, final_params)
    assert out3.shape == (B3, 1)
    assert jnp.allclose(out3, ref3, atol=1e-5, rtol=1e-5)

    print("KERNEL_OK")
</pallas_src>

<mosaic_0001>
module attributes {stable_mosaic.version = 11 : i64} {
  func.func @_car_insurance_kernel(%arg0: i32, %arg1: memref<1x256xf32, #tpu.memory_space<vmem>>, %arg2: memref<1x256xf32, #tpu.memory_space<vmem>>, %arg3: memref<3x256xf32, #tpu.memory_space<vmem>>, %arg4: memref<1x256xf32, #tpu.memory_space<vmem>>, %arg5: memref<3x256xf32, #tpu.memory_space<vmem>>, %arg6: memref<1x256xf32, #tpu.memory_space<vmem>>, %arg7: memref<60x10xf32, #tpu.memory_space<vmem>>, %arg8: memref<60x1xf32, #tpu.memory_space<vmem>>, %arg9: memref<1x60xf32, #tpu.memory_space<vmem>>, %arg10: memref<1x1xf32, #tpu.memory_space<vmem>>, %arg11: memref<1x256xf32, #tpu.memory_space<vmem>>) attributes {dimension_semantics = [#tpu.dimension_semantics<parallel>], iteration_bounds = array<i64: 3>, scalar_prefetch = 0 : i64, scratch_operands = 0 : i64, tpu.core_type = #tpu.core_type<tc>, window_params = [{transform_indices = @transform_0, window_bounds = array<i64: 1, 256>}, {transform_indices = @transform_1, window_bounds = array<i64: 1, 256>}, {transform_indices = @transform_2, window_bounds = array<i64: 3, 256>}, {transform_indices = @transform_3, window_bounds = array<i64: 1, 256>}, {transform_indices = @transform_4, window_bounds = array<i64: 3, 256>}, {transform_indices = @transform_5, window_bounds = array<i64: 1, 256>}, {pipeline_mode = #tpu.pipeline_mode<synchronous>, transform_indices = @transform_6, window_bounds = array<i64: 60, 10>}, {pipeline_mode = #tpu.pipeline_mode<synchronous>, transform_indices = @transform_7, window_bounds = array<i64: 60, 1>}, {pipeline_mode = #tpu.pipeline_mode<synchronous>, transform_indices = @transform_8, window_bounds = array<i64: 1, 60>}, {pipeline_mode = #tpu.pipeline_mode<synchronous>, transform_indices = @transform_9, window_bounds = array<i64: 1, 1>}, {transform_indices = @transform_10, window_bounds = array<i64: 1, 256>}]} {
    %c0 = arith.constant 0 : index
    %c0_0 = arith.constant 0 : index
    %0 = vector.load %arg1[%c0, %c0_0] : memref<1x256xf32, #tpu.memory_space<vmem>>, vector<1x256xf32>
    %c0_1 = arith.constant 0 : index
    %c0_2 = arith.constant 0 : index
    %1 = vector.load %arg2[%c0_1, %c0_2] : memref<1x256xf32, #tpu.memory_space<vmem>>, vector<1x256xf32>
    %c0_3 = arith.constant 0 : index
    %c0_4 = arith.constant 0 : index
    %2 = vector.load %arg3[%c0_3, %c0_4] : memref<3x256xf32, #tpu.memory_space<vmem>>, vector<3x256xf32>
    %c0_5 = arith.constant 0 : index
    %c0_6 = arith.constant 0 : index
    %3 = vector.load %arg4[%c0_5, %c0_6] : memref<1x256xf32, #tpu.memory_space<vmem>>, vector<1x256xf32>
    %c0_7 = arith.constant 0 : index
    %c0_8 = arith.constant 0 : index
    %4 = vector.load %arg5[%c0_7, %c0_8] : memref<3x256xf32, #tpu.memory_space<vmem>>, vector<3x256xf32>
    %c0_9 = arith.constant 0 : index
    %c0_10 = arith.constant 0 : index
    %5 = vector.load %arg6[%c0_9, %c0_10] : memref<1x256xf32, #tpu.memory_space<vmem>>, vector<1x256xf32>
    %6 = tpu.concatenate %0, %1, %2, %3, %4, %5 in 0 : vector<1x256xf32>, vector<1x256xf32>, vector<3x256xf32>, vector<1x256xf32>, vector<3x256xf32>, vector<1x256xf32> -> vector<10x256xf32>
    %c0_11 = arith.constant 0 : index
    %c0_12 = arith.constant 0 : index
    %7 = vector.load %arg7[%c0_11, %c0_12] : memref<60x10xf32, #tpu.memory_space<vmem>>, vector<60x10xf32>
    %cst = arith.constant dense<0.000000e+00> : vector<60x256xf32>
    %8 = tpu.matmul %7, %6, %cst {dimension_numbers = #tpu.dot_dimension_numbers<[1], [0], [0], [1], [0, 0, 1, 1], [], []>} : vector<60x10xf32>, vector<10x256xf32>, vector<60x256xf32> -> vector<60x256xf32>
    %c0_13 = arith.constant 0 : index
    %c0_14 = arith.constant 0 : index
    %9 = vector.load %arg8[%c0_13, %c0_14] : memref<60x1xf32, #tpu.memory_space<vmem>>, vector<60x1xf32>
    %10 = vector.broadcast %9 : vector<60x1xf32> to vector<60x256xf32>
    %11 = arith.addf %8, %10 : vector<60x256xf32>
    %cst_15 = arith.constant 0.000000e+00 : f32
    %12 = vector.broadcast %cst_15 : f32 to vector<60x256xf32>
    %13 = arith.maximumf %11, %12 : vector<60x256xf32>
    %c0_16 = arith.constant 0 : index
    %c0_17 = arith.constant 0 : index
    %14 = vector.load %arg9[%c0_16, %c0_17] : memref<1x60xf32, #tpu.memory_space<vmem>>, vector<1x60xf32>
    %cst_18 = arith.constant dense<0.000000e+00> : vector<1x256xf32>
    %15 = tpu.matmul %14, %13, %cst_18 {dimension_numbers = #tpu.dot_dimension_numbers<[1], [0], [0], [1], [0, 0, 1, 1], [], []>} : vector<1x60xf32>, vector<60x256xf32>, vector<1x256xf32> -> vector<1x256xf32>
    %c0_19 = arith.constant 0 : index
    %c0_20 = arith.constant 0 : index
    %16 = vector.load %arg10[%c0_19, %c0_20] : memref<1x1xf32, #tpu.memory_space<vmem>>, vector<1x1xf32>
    %17 = vector.broadcast %16 : vector<1x1xf32> to vector<1x256xf32>
    %18 = arith.addf %15, %17 : vector<1x256xf32>
    %c0_21 = arith.constant 0 : index
    %c0_22 = arith.constant 0 : index
    %19 = vector.load %arg11[%c0_21, %c0_22] : memref<1x256xf32, #tpu.memory_space<vmem>>, vector<1x256xf32>
    tpu.vector_store %arg11[%c0_21, %c0_22], %18 {strides = array<i32>} : memref<1x256xf32, #tpu.memory_space<vmem>>, vector<1x256xf32>,
    return
  }
  func.func @transform_0(%arg0: i32) -> (i32, i32) {
    %c0_i32 = arith.constant 0 : i32
    %c0_i32_0 = arith.constant 0 : i32
    return %c0_i32, %arg0 : i32, i32
  }
  func.func @transform_1(%arg0: i32) -> (i32, i32) {
    %c0_i32 = arith.constant 0 : i32
    %c0_i32_0 = arith.constant 0 : i32
    return %c0_i32, %arg0 : i32, i32
  }
  func.func @transform_2(%arg0: i32) -> (i32, i32) {
    %c0_i32 = arith.constant 0 : i32
    %c0_i32_0 = arith.constant 0 : i32
    return %c0_i32, %arg0 : i32, i32
  }
  func.func @transform_3(%arg0: i32) -> (i32, i32) {
    %c0_i32 = arith.constant 0 : i32
    %c0_i32_0 = arith.constant 0 : i32
    return %c0_i32, %arg0 : i32, i32
  }
  func.func @transform_4(%arg0: i32) -> (i32, i32) {
    %c0_i32 = arith.constant 0 : i32
    %c0_i32_0 = arith.constant 0 : i32
    return %c0_i32, %arg0 : i32, i32
  }
  func.func @transform_5(%arg0: i32) -> (i32, i32) {
    %c0_i32 = arith.constant 0 : i32
    %c0_i32_0 = arith.constant 0 : i32
    return %c0_i32, %arg0 : i32, i32
  }
  func.func @transform_6(%arg0: i32) -> (i32, i32) {
    %c0_i32 = arith.constant 0 : i32
    %c0_i32_0 = arith.constant 0 : i32
    %c0_i32_1 = arith.constant 0 : i32
    return %c0_i32, %c0_i32_0 : i32, i32
  }
  func.func @transform_7(%arg0: i32) -> (i32, i32) {
    %c0_i32 = arith.constant 0 : i32
    %c0_i32_0 = arith.constant 0 : i32
    %c0_i32_1 = arith.constant 0 : i32
    return %c0_i32, %c0_i32_0 : i32, i32
  }
  func.func @transform_8(%arg0: i32) -> (i32, i32) {
    %c0_i32 = arith.constant 0 : i32
    %c0_i32_0 = arith.constant 0 : i32
    %c0_i32_1 = arith.constant 0 : i32
    return %c0_i32, %c0_i32_0 : i32, i32
  }
  func.func @transform_9(%arg0: i32) -> (i32, i32) {
    %c0_i32 = arith.constant 0 : i32
    %c0_i32_0 = arith.constant 0 : i32
    %c0_i32_1 = arith.constant 0 : i32
    return %c0_i32, %c0_i32_0 : i32, i32
  }
  func.func @transform_10(%arg0: i32) -> (i32, i32) {
    %c0_i32 = arith.constant 0 : i32
    %c0_i32_0 = arith.constant 0 : i32
    return %c0_i32, %arg0 : i32, i32
  }
}

</mosaic_0001>

<llo_original>
// kernel: tpu_custom_call.1
$region0: #{tpu_custom_call.1}
  #allocation0 [shape = 'u32[]', space=smem, size = 0x4, offset = 0x4, fixed_abs, tag = 'smem constant byte address 0x4 - core index']
  #allocation1 [shape = 'u32[144,128]{1,0:T(1,128)}', space=vmem, size = 0x12000, scoped, tag = 'internal scratch']
  #allocation2 [shape = 'f32[1,1]{1,0:T(1,128)S(1)}', space=vmem, size = 0x200, scoped, tag = 'scoped memory for tpu_custom_call.1']
  %s0 = inlined_call_operand.vmem [shape: f32[1,700], index: 0, kind: input, shape index: {}]
  %s1 = inlined_call_operand.vmem [shape: f32[1,700], index: 1, kind: input, shape index: {}]
  %s2 = inlined_call_operand.vmem [shape: f32[3,700], index: 2, kind: input, shape index: {}]
  %s3 = inlined_call_operand.vmem [shape: f32[1,700], index: 3, kind: input, shape index: {}]
  %s4 = inlined_call_operand.vmem [shape: f32[3,700], index: 4, kind: input, shape index: {}]
  %s5 = inlined_call_operand.vmem [shape: f32[1,700], index: 5, kind: input, shape index: {}]
  %s6 = inlined_call_operand.vmem [shape: f32[60,10], index: 6, kind: input, shape index: {}]
  %s7 = inlined_call_operand.vmem [shape: f32[60,1], index: 7, kind: input, shape index: {}]
  %s8 = inlined_call_operand.vmem [shape: f32[1,60], index: 8, kind: input, shape index: {}]
  %s9 = inlined_call_operand.<no memory space> [shape: f32[1,1], index: 9, kind: input, shape index: {}]
  %s10 = inlined_call_operand.hbm [shape: f32[1,700], index: 10, kind: output, shape index: {}]
  %s11 = sld [smem:[#allocation0]]
  $region73: #{tpu_custom_call.1} parent=0
    _
  %s13 = ssub.s32 1, %s11
  %s14 = scalar_select 0, %s13, %s11
  %v15 = vstv %s9
  %16 = vst [vmem:[#allocation2] sm:$0x1] %v15
  $region1: #{tpu_custom_call.1} parent=0
    #allocation3 [shape = 'u8[2048]{0}', space=vmem, size = 0x800, scoped, tag = 'output window, operand 0']
    #allocation4 [shape = 's32[2]{0}', space=sflag, size = 0x8, scoped, tag = 'scoped memory for tpu_custom_call.1']
    %17 = vsyncpa [#allocation4], 0
    %s18 = scalar_lea.sflag [#allocation4], 1
    %19 = vsyncpa %s18, 0
    loop: start=0, step=1, limit=5
    $region2: #{tpu_custom_call.1} parent=1 // loop_pre_header
      _
    $region3: #{tpu_custom_call.1} parent=1 // loop_header
      %s21 = sphi 0, %s25
      %p22 = scmp.ge.s32.totalorder %s21, 5
      %s31 = sphi 0, %s33
      %s34 = sphi 0, %s31
      %s35 = sphi 0, %s34
      %s51 = sphi 0, %s35
      %s57 = sphi 0, %s59
      %s60 = sphi 0, %s57
      %s61 = sphi 0, %s60
      %s77 = sphi 0, %s61
      %s83 = sphi 0, %s85
      %s86 = sphi 0, %s83
      %s87 = sphi 0, %s86
      %s103 = sphi 0, %s87
      %s109 = sphi 0, %s111
      %s112 = sphi 0, %s109
      %s113 = sphi 0, %s112
      %s129 = sphi 0, %s113
      %s135 = sphi 0, %s137
      %s138 = sphi 0, %s135
      %s139 = sphi 0, %s138
      %s155 = sphi 0, %s139
      %s161 = sphi 0, %s163
      %s164 = sphi 0, %s161
      %s165 = sphi 0, %s164
      %s181 = sphi 0, %s165
      %s185 = sphi 0, %s185
      %s187 = sphi 0, %s185
      %s188 = sphi 0, %s187
      %s202 = sphi 0, %s188
      %s206 = sphi 0, %s206
      %s208 = sphi 0, %s206
      %s209 = sphi 0, %s208
      %s223 = sphi 0, %s209
      %s227 = sphi 0, %s227
      %s229 = sphi 0, %s227
      %s230 = sphi 0, %s229
      %s244 = sphi 0, %s230
      %s248 = sphi 0, %s248
      %s250 = sphi 0, %s248
      %s251 = sphi 0, %s250
      %s265 = sphi 0, %s251
      %s271 = sphi 0, %s273
      %s274 = sphi 0, %s271
      %s275 = sphi 0, %s274
      %s291 = sphi 0, %s275
    $region4: #{tpu_custom_call.1} parent=1 // loop_header_branch
      %24 = sbr.rel (%p22) target = $region8
    $region5: #{tpu_custom_call.1} parent=1 // loop_body
      %s26 = ssub.s32 %s21, 1
      %s27 = ssub.s32 %s21, 2
      %s28 = sadd.s32 %s21, 1
      %s29 = ssub.s32 %s21, %s28
      %p30 = scmp.eq.s32.totalorder %s29, 0
      %s32 = sadd.s32 %s31, 1
      %s33 = scalar_select %p30, %s31, %s32
      %p36 = pneg %p30
      %p37 = scmp.eq.s32.totalorder %s21, 2
      %p38 = por %p36, %p37
      %p39 = scmp.ne.s32.totalorder %s31, %s34
      %p40 = scmp.eq.s32.totalorder %s21, 0
      %p41 = por %p39, %p40
      %p42 = scmp.ne.s32.totalorder %s31, %s34
      %p43 = scmp.eq.s32.totalorder %s26, 2
      %p44 = por %p42, %p43
      %p45 = scmp.ne.s32.totalorder %s34, %s35
      %p46 = scmp.eq.s32.totalorder %s26, 0
      %p47 = por %p45, %p46
      %p48 = scmp.ne.s32.totalorder %s34, %s35
      %p49 = scmp.eq.s32.totalorder %s27, 2
      %p50 = por %p48, %p49
      %p52 = scmp.ne.s32.totalorder %s35, %s51
      %p53 = scmp.eq.s32.totalorder %s27, 0
      %p54 = por %p52, %p53
      %s55 = ssub.s32 %s21, %s28
      %p56 = scmp.eq.s32.totalorder %s55, 0
      %s58 = sadd.s32 %s57, 1
      %s59 = scalar_select %p56, %s57, %s58
      %p62 = pneg %p56
      %p63 = scmp.eq.s32.totalorder %s21, 2
      %p64 = por %p62, %p63
      %p65 = scmp.ne.s32.totalorder %s57, %s60
      %p66 = scmp.eq.s32.totalorder %s21, 0
      %p67 = por %p65, %p66
      %p68 = scmp.ne.s32.totalorder %s57, %s60
      %p69 = scmp.eq.s32.totalorder %s26, 2
      %p70 = por %p68, %p69
      %p71 = scmp.ne.s32.totalorder %s60, %s61
      %p72 = scmp.eq.s32.totalorder %s26, 0
      %p73 = por %p71, %p72
      %p74 = scmp.ne.s32.totalorder %s60, %s61
      %p75 = scmp.eq.s32.totalorder %s27, 2
      %p76 = por %p74, %p75
      %p78 = scmp.ne.s32.totalorder %s61, %s77
      %p79 = scmp.eq.s32.totalorder %s27, 0
      %p80 = por %p78, %p79
      %s81 = ssub.s32 %s21, %s28
      %p82 = scmp.eq.s32.totalorder %s81, 0
      %s84 = sadd.s32 %s83, 1
      %s85 = scalar_select %p82, %s83, %s84
      %p88 = pneg %p82
      %p89 = scmp.eq.s32.totalorder %s21, 2
      %p90 = por %p88, %p89
      %p91 = scmp.ne.s32.totalorder %s83, %s86
      %p92 = scmp.eq.s32.totalorder %s21, 0
      %p93 = por %p91, %p92
      %p94 = scmp.ne.s32.totalorder %s83, %s86
      %p95 = scmp.eq.s32.totalorder %s26, 2
      %p96 = por %p94, %p95
      %p97 = scmp.ne.s32.totalorder %s86, %s87
      %p98 = scmp.eq.s32.totalorder %s26, 0
      %p99 = por %p97, %p98
      %p100 = scmp.ne.s32.totalorder %s86, %s87
      %p101 = scmp.eq.s32.totalorder %s27, 2
      %p102 = por %p100, %p101
      %p104 = scmp.ne.s32.totalorder %s87, %s103
      %p105 = scmp.eq.s32.totalorder %s27, 0
      %p106 = por %p104, %p105
      %s107 = ssub.s32 %s21, %s28
      %p108 = scmp.eq.s32.totalorder %s107, 0
      %s110 = sadd.s32 %s109, 1
      %s111 = scalar_select %p108, %s109, %s110
      %p114 = pneg %p108
      %p115 = scmp.eq.s32.totalorder %s21, 2
      %p116 = por %p114, %p115
      %p117 = scmp.ne.s32.totalorder %s109, %s112
      %p118 = scmp.eq.s32.totalorder %s21, 0
      %p119 = por %p117, %p118
      %p120 = scmp.ne.s32.totalorder %s109, %s112
      %p121 = scmp.eq.s32.totalorder %s26, 2
      %p122 = por %p120, %p121
      %p123 = scmp.ne.s32.totalorder %s112, %s113
      %p124 = scmp.eq.s32.totalorder %s26, 0
      %p125 = por %p123, %p124
      %p126 = scmp.ne.s32.totalorder %s112, %s113
      %p127 = scmp.eq.s32.totalorder %s27, 2
      %p128 = por %p126, %p127
      %p130 = scmp.ne.s32.totalorder %s113, %s129
      %p131 = scmp.eq.s32.totalorder %s27, 0
      %p132 = por %p130, %p131
      %s133 = ssub.s32 %s21, %s28
      %p134 = scmp.eq.s32.totalorder %s133, 0
      %s136 = sadd.s32 %s135, 1
      %s137 = scalar_select %p134, %s135, %s136
      %p140 = pneg %p134
      %p141 = scmp.eq.s32.totalorder %s21, 2
      %p142 = por %p140, %p141
      %p143 = scmp.ne.s32.totalorder %s135, %s138
      %p144 = scmp.eq.s32.totalorder %s21, 0
      %p145 = por %p143, %p144
      %p146 = scmp.ne.s32.totalorder %s135, %s138
      %p147 = scmp.eq.s32.totalorder %s26, 2
      %p148 = por %p146, %p147
      %p149 = scmp.ne.s32.totalorder %s138, %s139
      %p150 = scmp.eq.s32.totalorder %s26, 0
      %p151 = por %p149, %p150
      %p152 = scmp.ne.s32.totalorder %s138, %s139
      %p153 = scmp.eq.s32.totalorder %s27, 2
      %p154 = por %p152, %p153
      %p156 = scmp.ne.s32.totalorder %s139, %s155
      %p157 = scmp.eq.s32.totalorder %s27, 0
      %p158 = por %p156, %p157
      %s159 = ssub.s32 %s21, %s28
      %p160 = scmp.eq.s32.totalorder %s159, 0
      %s162 = sadd.s32 %s161, 1
      %s163 = scalar_select %p160, %s161, %s162
      %p166 = pneg %p160
      %p167 = scmp.eq.s32.totalorder %s21, 2
      %p168 = por %p166, %p167
      %p169 = scmp.ne.s32.totalorder %s161, %s164
      %p170 = scmp.eq.s32.totalorder %s21, 0
      %p171 = por %p169, %p170
      %p172 = scmp.ne.s32.totalorder %s161, %s164
      %p173 = scmp.eq.s32.totalorder %s26, 2
      %p174 = por %p172, %p173
      %p175 = scmp.ne.s32.totalorder %s164, %s165
      %p176 = scmp.eq.s32.totalorder %s26, 0
      %p177 = por %p175, %p176
      %p178 = scmp.ne.s32.totalorder %s164, %s165
      %p179 = scmp.eq.s32.totalorder %s27, 2
      %p180 = por %p178, %p179
      %p182 = scmp.ne.s32.totalorder %s165, %s181
      %p183 = scmp.eq.s32.totalorder %s27, 0
      %p184 = por %p182, %p183
      %s186 = sadd.s32 %s185, 1
      %p189 = scmp.eq.s32.totalorder %s21, 2
      %p190 = scmp.ne.s32.totalorder %s185, %s187
      %p191 = scmp.eq.s32.totalorder %s21, 0
      %p192 = por %p190, %p191
      %p193 = scmp.ne.s32.totalorder %s185, %s187
      %p194 = scmp.eq.s32.totalorder %s26, 2
      %p195 = por %p193, %p194
      %p196 = scmp.ne.s32.totalorder %s187, %s188
      %p197 = scmp.eq.s32.totalorder %s26, 0
      %p198 = por %p196, %p197
      %p199 = scmp.ne.s32.totalorder %s187, %s188
      %p200 = scmp.eq.s32.totalorder %s27, 2
      %p201 = por %p199, %p200
      %p203 = scmp.ne.s32.totalorder %s188, %s202
      %p204 = scmp.eq.s32.totalorder %s27, 0
      %p205 = por %p203, %p204
      %s207 = sadd.s32 %s206, 1
      %p210 = scmp.eq.s32.totalorder %s21, 2
      %p211 = scmp.ne.s32.totalorder %s206, %s208
      %p212 = scmp.eq.s32.totalorder %s21, 0
      %p213 = por %p211, %p212
      %p214 = scmp.ne.s32.totalorder %s206, %s208
      %p215 = scmp.eq.s32.totalorder %s26, 2
      %p216 = por %p214, %p215
      %p217 = scmp.ne.s32.totalorder %s208, %s209
      %p218 = scmp.eq.s32.totalorder %s26, 0
      %p219 = por %p217, %p218
      %p220 = scmp.ne.s32.totalorder %s208, %s209
      %p221 = scmp.eq.s32.totalorder %s27, 2
      %p222 = por %p220, %p221
      %p224 = scmp.ne.s32.totalorder %s209, %s223
      %p225 = scmp.eq.s32.totalorder %s27, 0
      %p226 = por %p224, %p225
      %s228 = sadd.s32 %s227, 1
      %p231 = scmp.eq.s32.totalorder %s21, 2
      %p232 = scmp.ne.s32.totalorder %s227, %s229
      %p233 = scmp.eq.s32.totalorder %s21, 0
      %p234 = por %p232, %p233
      %p235 = scmp.ne.s32.totalorder %s227, %s229
      %p236 = scmp.eq.s32.totalorder %s26, 2
      %p237 = por %p235, %p236
      %p238 = scmp.ne.s32.totalorder %s229, %s230
      %p239 = scmp.eq.s32.totalorder %s26, 0
      %p240 = por %p238, %p239
      %p241 = scmp.ne.s32.totalorder %s229, %s230
      %p242 = scmp.eq.s32.totalorder %s27, 2
      %p243 = por %p241, %p242
      %p245 = scmp.ne.s32.totalorder %s230, %s244
      %p246 = scmp.eq.s32.totalorder %s27, 0
      %p247 = por %p245, %p246
      %s249 = sadd.s32 %s248, 1
      %p252 = scmp.eq.s32.totalorder %s21, 2
      %p253 = scmp.ne.s32.totalorder %s248, %s250
      %p254 = scmp.eq.s32.totalorder %s21, 0
      %p255 = por %p253, %p254
      %p256 = scmp.ne.s32.totalorder %s248, %s250
      %p257 = scmp.eq.s32.totalorder %s26, 2
      %p258 = por %p256, %p257
      %p259 = scmp.ne.s32.totalorder %s250, %s251
      %p260 = scmp.eq.s32.totalorder %s26, 0
      %p261 = por %p259, %p260
      %p262 = scmp.ne.s32.totalorder %s250, %s251
      %p263 = scmp.eq.s32.totalorder %s27, 2
      %p264 = por %p262, %p263
      %p266 = scmp.ne.s32.totalorder %s251, %s265
      %p267 = scmp.eq.s32.totalorder %s27, 0
      %p268 = por %p266, %p267
      %s269 = ssub.s32 %s21, %s28
      %p270 = scmp.eq.s32.totalorder %s269, 0
      %s272 = sadd.s32 %s271, 1
      %s273 = scalar_select %p270, %s271, %s272
      %p276 = pneg %p270
      %p277 = scmp.eq.s32.totalorder %s21, 2
      %p278 = por %p276, %p277
      %p279 = scmp.ne.s32.totalorder %s271, %s274
      %p280 = scmp.eq.s32.totalorder %s21, 0
      %p281 = por %p279, %p280
      %p282 = scmp.ne.s32.totalorder %s271, %s274
      %p283 = scmp.eq.s32.totalorder %s26, 2
      %p284 = por %p282, %p283
      %p285 = scmp.ne.s32.totalorder %s274, %s275
      %p286 = scmp.eq.s32.totalorder %s26, 0
      %p287 = por %p285, %p286
      %p288 = scmp.ne.s32.totalorder %s274, %s275
      %p289 = scmp.eq.s32.totalorder %s27, 2
      %p290 = por %p288, %p289
      %p292 = scmp.ne.s32.totalorder %s275, %s291
      %p293 = scmp.eq.s32.totalorder %s27, 0
      %p294 = por %p292, %p293
      %p295 = scmp.le.s32.totalorder 1, %s21
      %p296 = scmp.lt.s32.totalorder %s21, 4
      %p297 = pnand %p295, %p296
      %p298 = pneg %p297
      // Predicated region
      $region9: #{tpu_custom_call.1} parent=5 // pred_check
        _
      $region10: #{tpu_custom_call.1} parent=5 // pred_check_branch
        %300 = sbr.rel (%p297) target = $region12
      $region11: #{tpu_custom_call.1} parent=5 // pred_region
        %s301 = ssub.s32 %s21, 1
        // Predicated region
        $region13: #{tpu_custom_call.1} parent=11 // pred_check
          %p302 = pneg %p198
        $region14: #{tpu_custom_call.1} parent=11 // pred_check_branch
          %304 = sbr.rel (%p302) target = $region16
        $region15: #{tpu_custom_call.1} parent=11 // pred_region
          _
        $region16: #{tpu_custom_call.1} parent=11 // pred_fallthru
          _
        // Predicated region
        $region17: #{tpu_custom_call.1} parent=11 // pred_check
          %p305 = pneg %p219
        $region18: #{tpu_custom_call.1} parent=11 // pred_check_branch
          %307 = sbr.rel (%p305) target = $region20
        $region19: #{tpu_custom_call.1} parent=11 // pred_region
          _
        $region20: #{tpu_custom_call.1} parent=11 // pred_fallthru
          _
        // Predicated region
        $region21: #{tpu_custom_call.1} parent=11 // pred_check
          %p308 = pneg %p240
        $region22: #{tpu_custom_call.1} parent=11 // pred_check_branch
          %310 = sbr.rel (%p308) target = $region24
        $region23: #{tpu_custom_call.1} parent=11 // pred_region
          _
        $region24: #{tpu_custom_call.1} parent=11 // pred_fallthru
          _
        // Predicated region
        $region25: #{tpu_custom_call.1} parent=11 // pred_check
          %p311 = pneg %p261
        $region26: #{tpu_custom_call.1} parent=11 // pred_check_branch
          %313 = sbr.rel (%p311) target = $region28
        $region27: #{tpu_custom_call.1} parent=11 // pred_region
          _
        $region28: #{tpu_custom_call.1} parent=11 // pred_fallthru
          _
      $region12: #{tpu_custom_call.1} parent=5 // pred_fallthru
        _
      %p314 = scmp.lt.s32.totalorder %s21, 3
      // Predicated region
      $region29: #{tpu_custom_call.1} parent=5 // pred_check
        %p315 = pneg %p314
      $region30: #{tpu_custom_call.1} parent=5 // pred_check_branch
        %317 = sbr.rel (%p315) target = $region32
      $region31: #{tpu_custom_call.1} parent=5 // pred_region
        // Predicated region
        $region33: #{tpu_custom_call.1} parent=31 // pred_check
          %p318 = pneg %p41
        $region34: #{tpu_custom_call.1} parent=31 // pred_check_branch
          %320 = sbr.rel (%p318) target = $region36
        $region35: #{tpu_custom_call.1} parent=31 // pred_region
          %s321 = smul.u32 2, %s21
          %p322 = scmp.lt.s32.totalorder %s321, 5
          %s323 = scalar_select %p322, %s321, 5
          %s324 = scalar_lea.vmem %s0, %s323
          %s325 = smul.u32 2, %s21
        $region36: #{tpu_custom_call.1} parent=31 // pred_fallthru
          _
        // Predicated region
        $region37: #{tpu_custom_call.1} parent=31 // pred_check
          %p326 = pneg %p67
        $region38: #{tpu_custom_call.1} parent=31 // pred_check_branch
          %328 = sbr.rel (%p326) target = $region40
        $region39: #{tpu_custom_call.1} parent=31 // pred_region
          %s329 = smul.u32 2, %s21
          %p330 = scmp.lt.s32.totalorder %s329, 5
          %s331 = scalar_select %p330, %s329, 5
          %s332 = scalar_lea.vmem %s1, %s331
          %s333 = smul.u32 2, %s21
        $region40: #{tpu_custom_call.1} parent=31 // pred_fallthru
          _
        // Predicated region
        $region41: #{tpu_custom_call.1} parent=31 // pred_check
          %p334 = pneg %p93
        $region42: #{tpu_custom_call.1} parent=31 // pred_check_branch
          %336 = sbr.rel (%p334) target = $region44
        $region43: #{tpu_custom_call.1} parent=31 // pred_region
          %s337 = smul.u32 2, %s21
          %p338 = scmp.lt.s32.totalorder %s337, 5
          %s339 = scalar_select %p338, %s337, 5
          %s340 = smul.addr %s339, 4
          %s341 = scalar_lea.vmem %s2, %s340
          %s342 = smul.u32 2, %s21
        $region44: #{tpu_custom_call.1} parent=31 // pred_fallthru
          _
        // Predicated region
        $region45: #{tpu_custom_call.1} parent=31 // pred_check
          %p343 = pneg %p119
        $region46: #{tpu_custom_call.1} parent=31 // pred_check_branch
          %345 = sbr.rel (%p343) target = $region48
        $region47: #{tpu_custom_call.1} parent=31 // pred_region
          %s346 = smul.u32 2, %s21
          %p347 = scmp.lt.s32.totalorder %s346, 5
          %s348 = scalar_select %p347, %s346, 5
          %s349 = scalar_lea.vmem %s3, %s348
          %s350 = smul.u32 2, %s21
        $region48: #{tpu_custom_call.1} parent=31 // pred_fallthru
          _
        // Predicated region
        $region49: #{tpu_custom_call.1} parent=31 // pred_check
          %p351 = pneg %p145
        $region50: #{tpu_custom_call.1} parent=31 // pred_check_branch
          %353 = sbr.rel (%p351) target = $region52
        $region51: #{tpu_custom_call.1} parent=31 // pred_region
          %s354 = smul.u32 2, %s21
          %p355 = scmp.lt.s32.totalorder %s354, 5
          %s356 = scalar_select %p355, %s354, 5
          %s357 = smul.addr %s356, 4
          %s358 = scalar_lea.vmem %s4, %s357
          %s359 = smul.u32 2, %s21
        $region52: #{tpu_custom_call.1} parent=31 // pred_fallthru
          _
        // Predicated region
        $region53: #{tpu_custom_call.1} parent=31 // pred_check
          %p360 = pneg %p171
        $region54: #{tpu_custom_call.1} parent=31 // pred_check_branch
          %362 = sbr.rel (%p360) target = $region56
        $region55: #{tpu_custom_call.1} parent=31 // pred_region
          %s363 = smul.u32 2, %s21
          %p364 = scmp.lt.s32.totalorder %s363, 5
          %s365 = scalar_select %p364, %s363, 5
          %s366 = scalar_lea.vmem %s5, %s365
          %s367 = smul.u32 2, %s21
        $region56: #{tpu_custom_call.1} parent=31 // pred_fallthru
          _
      $region32: #{tpu_custom_call.1} parent=5 // pred_fallthru
        _
      %p368 = scmp.le.s32.totalorder 1, %s21
      %p369 = scmp.lt.s32.totalorder %s21, 4
      %p370 = pnand %p368, %p369
      %p371 = pneg %p370
      // Predicated region
      $region57: #{tpu_custom_call.1} parent=5 // pred_check
        _
      $region58: #{tpu_custom_call.1} parent=5 // pred_check_branch
        %373 = sbr.rel (%p370) target = $region60
      $region59: #{tpu_custom_call.1} parent=5 // pred_region
        %s374 = ssub.s32 %s21, 1
        %s375 = smul.u32 2, %s26
        %p376 = scmp.lt.s32.totalorder %s375, 5
        %s377 = scalar_select %p376, %s375, 5
        %s378 = scalar_lea.vmem %s0, %s377
        %p379 = pneg %p47
        %p380 = pneg %p44
        %s381 = smul.u32 2, %s26
        %p382 = scmp.lt.s32.totalorder %s381, 5
        %s383 = scalar_select %p382, %s381, 5
        %s384 = scalar_lea.vmem %s1, %s383
        %p385 = pneg %p73
        %p386 = pneg %p70
        %s387 = smul.u32 2, %s26
        %p388 = scmp.lt.s32.totalorder %s387, 5
        %s389 = scalar_select %p388, %s387, 5
        %s390 = smul.addr %s389, 4
        %s391 = scalar_lea.vmem %s2, %s390
        %p392 = pneg %p99
        %p393 = pneg %p96
        %s394 = smul.u32 2, %s26
        %p395 = scmp.lt.s32.totalorder %s394, 5
        %s396 = scalar_select %p395, %s394, 5
        %s397 = scalar_lea.vmem %s3, %s396
        %p398 = pneg %p125
        %p399 = pneg %p122
        %s400 = smul.u32 2, %s26
        %p401 = scmp.lt.s32.totalorder %s400, 5
        %s402 = scalar_select %p401, %s400, 5
        %s403 = smul.addr %s402, 4
        %s404 = scalar_lea.vmem %s4, %s403
        %p405 = pneg %p151
        %p406 = pneg %p148
        %s407 = smul.u32 2, %s26
        %p408 = scmp.lt.s32.totalorder %s407, 5
        %s409 = scalar_select %p408, %s407, 5
        %s410 = scalar_lea.vmem %s5, %s409
        %p411 = pneg %p177
        %p412 = pneg %p174
        %p413 = pneg %p198
        %p414 = pneg %p195
        %p415 = pneg %p219
        %p416 = pneg %p216
        %p417 = pneg %p240
        %p418 = pneg %p237
        %p419 = pneg %p261
        %p420 = pneg %p258
        %p421 = pneg %p287
        %p422 = pneg %p284
        %s423 = sand.u32 %s274, 1
        %s424 = scalar_lea.sflag [#allocation4], %s423
        %s425 = sand.u32 %s274, 1
        %s426 = smul.addr %s425, 2
        %s427 = scalar_lea.vmem [#allocation3], %s426
        %s428 = smul.u32 2, %s26
        %p429 = scmp.lt.s32.totalorder %s428, 5
        %s430 = scalar_select %p429, %s428, 5
        %s431 = scalar_lea.vmem %s0, %s430
        %s432 = smul.u32 2, %s26
        %s433 = smul.u32 2, %s26
        %p434 = scmp.lt.s32.totalorder %s433, 5
        %s435 = scalar_select %p434, %s433, 5
        %s436 = scalar_lea.vmem %s1, %s435
        %s437 = smul.u32 2, %s26
        %s438 = smul.u32 2, %s26
        %p439 = scmp.lt.s32.totalorder %s438, 5
        %s440 = scalar_select %p439, %s438, 5
        %s441 = smul.addr %s440, 4
        %s442 = scalar_lea.vmem %s2, %s441
        %s443 = smul.u32 2, %s26
        %s444 = smul.u32 2, %s26
        %p445 = scmp.lt.s32.totalorder %s444, 5
        %s446 = scalar_select %p445, %s444, 5
        %s447 = scalar_lea.vmem %s3, %s446
        %s448 = smul.u32 2, %s26
        %s449 = smul.u32 2, %s26
        %p450 = scmp.lt.s32.totalorder %s449, 5
        %s451 = scalar_select %p450, %s449, 5
        %s452 = smul.addr %s451, 4
        %s453 = scalar_lea.vmem %s4, %s452
        %s454 = smul.u32 2, %s26
        %s455 = smul.u32 2, %s26
        %p456 = scmp.lt.s32.totalorder %s455, 5
        %s457 = scalar_select %p456, %s455, 5
        %s458 = scalar_lea.vmem %s5, %s457
        %s459 = smul.u32 2, %s26
        %s460 = smul.u32 2, %s26
        %v461 = vld [vmem:[%s431] sm:$0x3]
        %v462 = vld [vmem:[%s436] sm:$0x3]
        %v463 = vld [vmem:[%s442] sm:$0x77]
        %v464 = vld [vmem:[%s447] sm:$0x3]
        %v465 = vld [vmem:[%s453] sm:$0x77]
        %v466 = vld [vmem:[%s458] sm:$0x3]
        %v468 = vlaneseq
        %v469 = vshrl.u32 %v468, 7
        %v470 = vsub.s32 0, %v469
        %v471 = vrot.slane %v461, %v470
        %v472 = vlaneseq
        %v473 = vshrl.u32 %v472, 7
        %v474 = vsub.s32 1, %v473
        %v475 = vrot.slane %v461, %v474
        %v479 = vlaneseq
        %v480 = vshrl.u32 %v479, 7
        %v481 = vsub.s32 0, %v480
        %v482 = vrot.slane %v462, %v481
        %v483 = vlaneseq
        %v484 = vshrl.u32 %v483, 7
        %v485 = vsub.s32 1, %v484
        %v486 = vrot.slane %v462, %v485
        %v490 = vcombine.high %v463, %v463
        %v491 = vrot.slane %v463, 6
        %v492 = vrot.slane %v490, 6
        %v496 = vlaneseq
        %v497 = vshrl.u32 %v496, 7
        %v498 = vsub.s32 0, %v497
        %v499 = vrot.slane %v464, %v498
        %v500 = vlaneseq
        %v501 = vshrl.u32 %v500, 7
        %v502 = vsub.s32 1, %v501
        %v503 = vrot.slane %v464, %v502
        %v507 = vcombine.high %v465, %v465
        %v508 = vrot.slane %v465, 2
        %v509 = vrot.slane %v507, 2
        %v513 = vlaneseq
        %v514 = vshrl.u32 %v513, 7
        %v515 = vsub.s32 0, %v514
        %v516 = vrot.slane %v466, %v515
        %v517 = vlaneseq
        %v518 = vshrl.u32 %v517, 7
        %v519 = vsub.s32 1, %v518
        %v520 = vrot.slane %v466, %v519
        %vm523 = vcmask 1040384
        %v524 = vsel %vm523, %v471, %v482
        %v525 = vsel %vm523, %v475, %v486
        %vm526 = vcmask 1041408
        %v527 = vsel %vm526, %v524, %v491
        %v528 = vsel %vm526, %v525, %v492
        %vm529 = vcmask 1044480
        %v530 = vsel %vm529, %v527, %v499
        %v531 = vsel %vm529, %v528, %v503
        %vm532 = vcmask 1045504
        %v533 = vsel %vm532, %v530, %v508
        %v534 = vsel %vm532, %v531, %v509
        %v535 = vsel %vm523, %v508, %v516
        %v536 = vsel %vm523, %v509, %v520
        %v537 = vld [vmem:[%s6] sm:$0xff]
        %v538 = vld [vmem:[%s6 + $0x8] sm:$0xff]
        %v539 = vld [vmem:[%s6 + $0x10] sm:$0xff]
        %v540 = vld [vmem:[%s6 + $0x18] sm:$0xff]
        %v541 = vld [vmem:[%s6 + $0x20] sm:$0xff]
        %v542 = vld [vmem:[%s6 + $0x28] sm:$0xff]
        %v543 = vld [vmem:[%s6 + $0x30] sm:$0xff]
        %v544 = vld [vmem:[%s6 + $0x38] sm:$0xf]
        %v545 = vld [vmem:[%s7] sm:$0xff]
        %v546 = vld [vmem:[%s7 + $0x8] sm:$0xff]
        %v547 = vld [vmem:[%s7 + $0x10] sm:$0xff]
        %v548 = vld [vmem:[%s7 + $0x18] sm:$0xff]
        %v549 = vld [vmem:[%s7 + $0x20] sm:$0xff]
        %v550 = vld [vmem:[%s7 + $0x28] sm:$0xff]
        %v551 = vld [vmem:[%s7 + $0x30] sm:$0xff]
        %v552 = vld [vmem:[%s7 + $0x38] sm:$0xf]
        %554 = vset.pattern.permute.xlu0 0
        %555 = vperm.xlu0 %554, %v545
        %v556 = vpop.permute.xlu0 %555
        %559 = vset.pattern.permute.xlu0 0
        %560 = vperm.xlu0 %559, %v546
        %v561 = vpop.permute.xlu0 %560
        %564 = vset.pattern.permute.xlu0 0
        %565 = vperm.xlu0 %564, %v547
        %v566 = vpop.permute.xlu0 %565
        %569 = vset.pattern.permute.xlu0 0
        %570 = vperm.xlu0 %569, %v548
        %v571 = vpop.permute.xlu0 %570
        %574 = vset.pattern.permute.xlu0 0
        %575 = vperm.xlu0 %574, %v549
        %v576 = vpop.permute.xlu0 %575
        %579 = vset.pattern.permute.xlu0 0
        %580 = vperm.xlu0 %579, %v550
        %v581 = vpop.permute.xlu0 %580
        %584 = vset.pattern.permute.xlu0 0
        %585 = vperm.xlu0 %584, %v551
        %v586 = vpop.permute.xlu0 %585
        %589 = vset.pattern.permute.xlu0 0
        %590 = vperm.xlu0 %589, %v552
        %v591 = vpop.permute.xlu0 %590
        %vm593 = vcmask 80896
        %v595 = vsel %vm593, %v537, 0
        %v598 = vsel %vm593, %v538, 0
        %v601 = vsel %vm593, %v539, 0
        %v604 = vsel %vm593, %v540, 0
        %v607 = vsel %vm593, %v541, 0
        %v610 = vsel %vm593, %v542, 0
        %v613 = vsel %vm593, %v543, 0
        %v616 = vsel %vm593, %v544, 0
        %v619 = vsel %vm526, %v535, 0
        %v622 = vsel %vm526, %v536, 0
        %624 = vmatprep.subr.mxu0 %v534
        %625 = vmatpush1.msra.mxu0 %v533
        %626 = vmatprep.subr.mxu0 %v622
        %627 = vmatpush1.msra.mxu0 %v619
        %628 = vmatprep.subr.mxu0 0.0
        %629 = vmatpush1.msra.mxu0 0.0
        %630 = vmatprep.subr.mxu0 0.0
        %631 = vmatpush1.msra.mxu0 0.0
        %632 = vmatprep.subr.mxu0 0.0
        %633 = vmatpush1.msra.mxu0 0.0
        %634 = vmatprep.subr.mxu0 0.0
        %635 = vmatpush1.msra.mxu0 0.0
        %636 = vmatprep.subr.mxu0 0.0
        %637 = vmatpush1.msra.mxu0 0.0
        %638 = vmatprep.subr.mxu0 0.0
        %639 = vmatpush1.msra.mxu0 0.0
        %640 = vmatprep.subr.mxu0 0.0
        %641 = vmatpush1.msra.mxu0 0.0
        %642 = vmatprep.subr.mxu0 0.0
        %643 = vmatpush1.msra.mxu0 0.0
        %644 = vmatprep.subr.mxu0 0.0
        %645 = vmatpush1.msra.mxu0 0.0
        %646 = vmatprep.subr.mxu0 0.0
        %647 = vmatpush1.msra.mxu0 0.0
        %648 = vmatprep.subr.mxu0 0.0
        %649 = vmatpush1.msra.mxu0 0.0
        %650 = vmatprep.subr.mxu0 0.0
        %651 = vmatpush1.msra.mxu0 0.0
        %652 = vmatprep.subr.mxu0 0.0
        %653 = vmatpush1.msra.mxu0 0.0
        %654 = vmatprep.subr.mxu0 0.0
        %655 = vmatpush1.msra.mxu0 0.0
        %656 = vmatprep.subr.mxu0 0.0
        %657 = vmatpush1.msra.mxu0 0.0
        %658 = vmatprep.subr.mxu0 0.0
        %659 = vmatpush1.msra.mxu0 0.0
        %660 = vmatprep.subr.mxu0 0.0
        %661 = vmatpush1.msra.mxu0 0.0
        %662 = vmatprep.subr.mxu0 0.0
        %663 = vmatpush1.msra.mxu0 0.0
        %664 = vmatprep.subr.mxu0 0.0
        %665 = vmatpush1.msra.mxu0 0.0
        %666 = vmatprep.subr.mxu0 0.0
        %667 = vmatpush1.msra.mxu0 0.0
        %668 = vmatprep.subr.mxu0 0.0
        %669 = vmatpush1.msra.mxu0 0.0
        %670 = vmatprep.subr.mxu0 0.0
        %671 = vmatpush1.msra.mxu0 0.0
        %672 = vmatprep.subr.mxu0 0.0
        %673 = vmatpush1.msra.mxu0 0.0
        %674 = vmatprep.subr.mxu0 0.0
        %675 = vmatpush1.msra.mxu0 0.0
        %676 = vmatprep.subr.mxu0 0.0
        %677 = vmatpush1.msra.mxu0 0.0
        %678 = vmatprep.subr.mxu0 0.0
        %679 = vmatpush1.msra.mxu0 0.0
        %680 = vmatprep.subr.mxu0 0.0
        %681 = vmatpush1.msra.mxu0 0.0
        %682 = vmatprep.subr.mxu0 0.0
        %683 = vmatpush1.msra.mxu0 0.0
        %684 = vmatprep.subr.mxu0 0.0
        %685 = vmatpush1.msra.mxu0 0.0
        %686 = vmatprep.subr.mxu0 0.0
        %687 = vmatpush1.msra.mxu0 0.0
        %688 = vmatprep.mubr.f32.mxu0 0.0
        %689 = vmatmul.mubr.f32.gmra.mrb[0].mxu0 %v595
        %v690 = vpop.f32.mrb[0].mxu0
        %v691 = vadd.f32 %v556, %v690
        %v692 = vpop.f32.mrb[0].mxu0
        %v693 = vadd.f32 %v556, %v692
        %694 = vmatprep.mubr.f32.mxu0 0.0
        %695 = vmatmul.mubr.f32.gmra.mrb[0].mxu0 %v598
        %v696 = vpop.f32.mrb[0].mxu0
        %v697 = vadd.f32 %v561, %v696
        %v698 = vpop.f32.mrb[0].mxu0
        %v699 = vadd.f32 %v561, %v698
        %700 = vmatprep.mubr.f32.mxu0 0.0
        %701 = vmatmul.mubr.f32.gmra.mrb[0].mxu0 %v601
        %v702 = vpop.f32.mrb[0].mxu0
        %v703 = vadd.f32 %v566, %v702
        %v704 = vpop.f32.mrb[0].mxu0
        %v705 = vadd.f32 %v566, %v704
        %706 = vmatprep.mubr.f32.mxu0 0.0
        %707 = vmatmul.mubr.f32.gmra.mrb[0].mxu0 %v604
        %v708 = vpop.f32.mrb[0].mxu0
        %v709 = vadd.f32 %v571, %v708
        %v710 = vpop.f32.mrb[0].mxu0
        %v711 = vadd.f32 %v571, %v710
        %712 = vmatprep.mubr.f32.mxu0 0.0
        %713 = vmatmul.mubr.f32.gmra.mrb[0].mxu0 %v607
        %v714 = vpop.f32.mrb[0].mxu0
        %v715 = vadd.f32 %v576, %v714
        %v716 = vpop.f32.mrb[0].mxu0
        %v717 = vadd.f32 %v576, %v716
        %718 = vmatprep.mubr.f32.mxu0 0.0
        %719 = vmatmul.mubr.f32.gmra.mrb[0].mxu0 %v610
        %v720 = vpop.f32.mrb[0].mxu0
        %v721 = vadd.f32 %v581, %v720
        %v722 = vpop.f32.mrb[0].mxu0
        %v723 = vadd.f32 %v581, %v722
        %724 = vmatprep.mubr.f32.mxu0 0.0
        %725 = vmatmul.mubr.f32.gmra.mrb[0].mxu0 %v613
        %v726 = vpop.f32.mrb[0].mxu0
        %v727 = vadd.f32 %v586, %v726
        %v728 = vpop.f32.mrb[0].mxu0
        %v729 = vadd.f32 %v586, %v728
        %730 = vmatprep.mubr.f32.mxu0 0.0
        %731 = vmatmul.mubr.f32.gmra.mrb[0].mxu0 %v616
        %v732 = vpop.f32.mrb[0].mxu0
        %v733 = vadd.f32 %v591, %v732
        %v734 = vpop.f32.mrb[0].mxu0
        %v735 = vadd.f32 %v591, %v734
        %736 = vdwg.mxu0
        %v737 = vmax.f32 %v691, 0.0
        %v738 = vmax.f32 %v693, 0.0
        %v739 = vmax.f32 %v697, 0.0
        %v740 = vmax.f32 %v699, 0.0
        %v741 = vmax.f32 %v703, 0.0
        %v742 = vmax.f32 %v705, 0.0
        %v743 = vmax.f32 %v709, 0.0
        %v744 = vmax.f32 %v711, 0.0
        %v745 = vmax.f32 %v715, 0.0
        %v746 = vmax.f32 %v717, 0.0
        %v747 = vmax.f32 %v721, 0.0
        %v748 = vmax.f32 %v723, 0.0
        %v749 = vmax.f32 %v727, 0.0
        %v750 = vmax.f32 %v729, 0.0
        %v751 = vmax.f32 %v733, 0.0
        %v752 = vmax.f32 %v735, 0.0
        %v753 = vld [vmem:[%s8] sm:$0x1]
        %v754 = vld [vmem:[#allocation2] sm:$0x1]
        %756 = vset.pattern.permute.xlu0 0
        %757 = vperm.xlu0 %756, %v754
        %v758 = vpop.permute.xlu0 %757
        %v760 = vlaneseq
        %v761 = vshrl.u32 %v760, 7
        %v762 = vsub.s32 0, %v761
        %v763 = vrot.slane %v758, %v762
        %vm764 = vcmask 490496
        %v766 = vsel %vm764, %v753, 0
        %vm768 = vcmask 1043456
        %v770 = vsel %vm768, %v751, 0
        %v773 = vsel %vm768, %v752, 0
        %775 = vmatprep.subr.mxu0 %v738
        %776 = vmatpush1.msra.mxu0 %v737
        %777 = vmatprep.subr.mxu0 %v740
        %778 = vmatpush1.msra.mxu0 %v739
        %779 = vmatprep.subr.mxu0 %v742
        %780 = vmatpush1.msra.mxu0 %v741
        %781 = vmatprep.subr.mxu0 %v744
        %782 = vmatpush1.msra.mxu0 %v743
        %783 = vmatprep.subr.mxu0 %v746
        %784 = vmatpush1.msra.mxu0 %v745
        %785 = vmatprep.subr.mxu0 %v748
        %786 = vmatpush1.msra.mxu0 %v747
        %787 = vmatprep.subr.mxu0 %v750
        %788 = vmatpush1.msra.mxu0 %v749
        %789 = vmatprep.subr.mxu0 %v773
        %790 = vmatpush1.msra.mxu0 %v770
        %791 = vmatprep.subr.mxu0 0.0
        %792 = vmatpush1.msra.mxu0 0.0
        %793 = vmatprep.subr.mxu0 0.0
        %794 = vmatpush1.msra.mxu0 0.0
        %795 = vmatprep.subr.mxu0 0.0
        %796 = vmatpush1.msra.mxu0 0.0
        %797 = vmatprep.subr.mxu0 0.0
        %798 = vmatpush1.msra.mxu0 0.0
        %799 = vmatprep.subr.mxu0 0.0
        %800 = vmatpush1.msra.mxu0 0.0
        %801 = vmatprep.subr.mxu0 0.0
        %802 = vmatpush1.msra.mxu0 0.0
        %803 = vmatprep.subr.mxu0 0.0
        %804 = vmatpush1.msra.mxu0 0.0
        %805 = vmatprep.subr.mxu0 0.0
        %806 = vmatpush1.msra.mxu0 0.0
        %807 = vmatprep.subr.mxu0 0.0
        %808 = vmatpush1.msra.mxu0 0.0
        %809 = vmatprep.subr.mxu0 0.0
        %810 = vmatpush1.msra.mxu0 0.0
        %811 = vmatprep.subr.mxu0 0.0
        %812 = vmatpush1.msra.mxu0 0.0
        %813 = vmatprep.subr.mxu0 0.0
        %814 = vmatpush1.msra.mxu0 0.0
        %815 = vmatprep.subr.mxu0 0.0
        %816 = vmatpush1.msra.mxu0 0.0
        %817 = vmatprep.subr.mxu0 0.0
        %818 = vmatpush1.msra.mxu0 0.0
        %819 = vmatprep.subr.mxu0 0.0
        %820 = vmatpush1.msra.mxu0 0.0
        %821 = vmatprep.subr.mxu0 0.0
        %822 = vmatpush1.msra.mxu0 0.0
        %823 = vmatprep.subr.mxu0 0.0
        %824 = vmatpush1.msra.mxu0 0.0
        %825 = vmatprep.subr.mxu0 0.0
        %826 = vmatpush1.msra.mxu0 0.0
        %827 = vmatprep.subr.mxu0 0.0
        %828 = vmatpush1.msra.mxu0 0.0
        %829 = vmatprep.subr.mxu0 0.0
        %830 = vmatpush1.msra.mxu0 0.0
        %831 = vmatprep.subr.mxu0 0.0
        %832 = vmatpush1.msra.mxu0 0.0
        %833 = vmatprep.subr.mxu0 0.0
        %834 = vmatpush1.msra.mxu0 0.0
        %835 = vmatprep.subr.mxu0 0.0
        %836 = vmatpush1.msra.mxu0 0.0
        %837 = vmatprep.subr.mxu0 0.0
        %838 = vmatpush1.msra.mxu0 0.0
        %839 = vmatprep.mubr.f32.mxu0 0.0
        %840 = vmatmul.mubr.f32.gmra.mrb[0].mxu0 %v766
        %v841 = vpop.f32.mrb[0].mxu0
        %v842 = vadd.f32 %v763, %v841
        %v843 = vpop.f32.mrb[0].mxu0
        %v844 = vadd.f32 %v763, %v843
        %845 = vdwg.mxu0
        %v848 = vcombine.low %v842, %v844
        %v850 = vunpack.c.l.s4 1966171168
        %v851 = vunpack.c.0.s8 %v850
        %v852 = vlaneseq
        %v853 = vshrl.u32 %v852, 7
        %v854 = vsub.s32 %v851, %v853
        %v855 = vrot.slane %v848, %v854
        %v857 = vunpack.c.l.s4 1966171168
        %v858 = vunpack.c.0.s8 %v857
        %v859 = vlaneseq
        %v860 = vshrl.u32 %v859, 7
        %v861 = vsub.s32 %v858, %v860
        %v862 = vrot.slane %v855, %v861
        %v864 = vlaneseq
        %vm865 = vcmp.ge.s32.totalorder %v864, 0
        %vm866 = vcmp.lt.s32.totalorder %v864, 256
        %vm867 = vmand %vm865, %vm866
        %868 = vst.msk [vmem:[%s427] sm:$0x3] %vm867, %v862
        %s869 = sand.u32 %s274, 1
        %s870 = scalar_lea.sflag [#allocation4], %s869
        %s871 = sand.u32 %s274, 1
        %s872 = smul.addr %s871, 2
        %s873 = scalar_lea.vmem [#allocation3], %s872
        // Predicated region
        $region61: #{tpu_custom_call.1} parent=59 // pred_check
          %p874 = pneg %p284
        $region62: #{tpu_custom_call.1} parent=59 // pred_check_branch
          %876 = sbr.rel (%p874) target = $region64
        $region63: #{tpu_custom_call.1} parent=59 // pred_region
          %s877 = smul.u32 2, %s26
          %s879 = ssub.s32 32, 32
          %880 = vsyncadd %s870, %s879
          %s881 = smul.addr %s877, 16
          %s882 = scalar_lea.hbm %s10, %s881
          %s884 = sshll.u32 %s873, 4
          %s885 = int_to_ptr.vmem [resolvable:$true] %s884
          %887 = dma.vmem_to_hbm [thread:$0]  %s885, 32, %s882, %s870
        $region64: #{tpu_custom_call.1} parent=59 // pred_fallthru
          _
      $region60: #{tpu_custom_call.1} parent=5 // pred_fallthru
        _
      %p888 = scmp.le.s32.totalorder 2, %s21
      // Predicated region
      $region65: #{tpu_custom_call.1} parent=5 // pred_check
        %p889 = pneg %p888
      $region66: #{tpu_custom_call.1} parent=5 // pred_check_branch
        %891 = sbr.rel (%p889) target = $region68
      $region67: #{tpu_custom_call.1} parent=5 // pred_region
        %s892 = ssub.s32 %s21, 2
        // Predicated region
        $region69: #{tpu_custom_call.1} parent=67 // pred_check
          %p893 = pneg %p290
        $region70: #{tpu_custom_call.1} parent=67 // pred_check_branch
          %895 = sbr.rel (%p893) target = $region72
        $region71: #{tpu_custom_call.1} parent=67 // pred_region
          %s896 = sand.u32 %s275, 1
          %s897 = scalar_lea.sflag [#allocation4], %s896
          %s898 = sand.u32 %s275, 1
          %s899 = smul.addr %s898, 2
          %s900 = scalar_lea.vmem [#allocation3], %s899
          %901 = dma.done %s897, 32
        $region72: #{tpu_custom_call.1} parent=67 // pred_fallthru
          _
      $region68: #{tpu_custom_call.1} parent=5 // pred_fallthru
        _
    $region6: #{tpu_custom_call.1} parent=1 // loop_footer
      %s25 = sadd.s32 1, %s21
    $region7: #{tpu_custom_call.1} parent=1 // loop_footer_branch
      %20 = sbr.rel target = $region3
    $region8: #{tpu_custom_call.1} parent=1 // loop_exit
      _
    %902 = vsyncpa [#allocation4], 1
    %s903 = scalar_lea.sflag [#allocation4], 1
    %904 = vsyncpa %s903, 1

</llo_original>
